<compile_context>
chip_gen: v7x
topology: tpu7x:2x2x1
jax: 0.10.0
libtpu: 0.0.40
codegen_flags: <defaults>
</compile_context>

<pallas_src>
import math
from functools import partial

import jax
import jax.numpy as jnp
from jax.experimental import pallas as pl
from jax.experimental.pallas import tpu as pltpu


_LANE_CANDIDATES = (1024, 512, 256, 128)


def _residual_kernel(fn):
    """Kernel: out = fn(x) + x, fused in VMEM."""
    def kernel(x_ref, o_ref):
        x = x_ref[...]
        o_ref[...] = fn(x) + x
    return kernel


def _residual_add_impl(fn, x, *, target_tile_bytes):
    """fn(x) + x via a single fused Pallas pass.

    `fn` must be purely elementwise: the input is flattened into a lane-dense
    2-D slab and the last tile may contain masked padding rows, so fn is
    evaluated on (and must tolerate) arbitrary values there; those results are
    dropped by the masked store.
    # TODO(synk): make tiling fn-aware if a non-elementwise wrapped module is needed.
    """
    orig_shape = x.shape
    dtype = x.dtype
    total = math.prod(orig_shape)
    itemsize = jnp.dtype(dtype).itemsize
    # Sublane packing quantum: 8 rows f32, 16 bf16, 32 int8/fp8.
    sub = max(8, 32 // itemsize)

    # Largest lane width (multiple of 128) that divides the element count:
    # reshape is then a free bitcast, no pad, no output slice.
    lane = next((l for l in _LANE_CANDIDATES if total % l == 0), None)

    x_flat = x.reshape(-1)
    padded_total = total
    if lane is None:
        # Rare fallback (total not a multiple of 128): minimal zero-pad
        # (< 128 elements) so the lane-dense reshape is legal; sliced off below.
        lane = 128
        padded_total = ((total + lane - 1) // lane) * lane
        x_flat = jnp.pad(x_flat, (0, padded_total - total))

    rows = padded_total // lane
    x2 = x_flat.reshape(rows, lane)

    # Rows per tile: ~target_tile_bytes, rounded down to the sublane quantum.
    tgt_rows = max(sub, (target_tile_bytes // (lane * itemsize)) // sub * sub)
    # Either the full row extent (always a legal block shape) or a multiple of
    # `sub` (legal; a partial tail block is masked by Pallas).
    block_rows = min(rows, tgt_rows)

    grid = (pl.cdiv(rows, block_rows),)

    # 2 double-buffered input tiles + 2 output tiles + headroom, capped below
    # v7x's 64 MiB physical VMEM (v5e/v6e have 128 MiB, so this is safe there).
    block_bytes = block_rows * lane * itemsize
    vmem_limit = min(56 << 20, max(16 << 20, 4 * block_bytes + (4 << 20)))

    out2 = pl.pallas_call(
        _residual_kernel(fn),
        out_shape=jax.ShapeDtypeStruct((rows, lane), dtype),
        grid=grid,
        in_specs=[pl.BlockSpec((block_rows, lane), lambda i: (i, 0))],
        out_specs=pl.BlockSpec((block_rows, lane), lambda i: (i, 0)),
        compiler_params=pltpu.CompilerParams(
            dimension_semantics=("parallel",),
            vmem_limit_bytes=vmem_limit,
        ),
    )(x2)

    out_flat = out2.reshape(-1)
    if padded_total != total:
        out_flat = out_flat[:total]
    return out_flat.reshape(orig_shape)


def make_residual_add(fn, *, target_tile_bytes=8 << 20):
    """Return a jitted callable computing ResidualAdd(fn): x -> fn(x) + x."""
    return jax.jit(partial(_residual_add_impl, fn,
                           target_tile_bytes=target_tile_bytes))


if __name__ == "__main__":
    key = jax.random.PRNGKey(0)
    # Small NCHW input consistent with the conv-style usage in the source file.
    x = jax.random.normal(key, (2, 4, 16, 16), dtype=jnp.float32)

    # The wrapped sub-module `fn` (arbitrary in the PyTorch code).  tanh-approx
    # GELU keeps the transcendental on the EUP (HBM-bound on v7x); it does not
    # bit-match PyTorch's default exact-erf nn.GELU -- use approximate=False
    # if that exact match is required.
    fn = partial(jax.nn.gelu, approximate=True)

    residual = make_residual_add(fn)
    y = jax.block_until_ready(residual(x))

    # Reference: fn(x) + x in plain JAX (same fn, so tolerances are tight).
    y_ref = fn(x) + x
    assert y.shape == x.shape and y.dtype == x.dtype
    assert jnp.allclose(y, y_ref, atol=1e-5, rtol=1e-5)

    print("KERNEL_OK")
</pallas_src>

<mosaic_0001>
module attributes {stable_mosaic.version = 11 : i64} {
  func.func @kernel(%arg0: i32, %arg1: memref<2x1024xf32, #tpu.memory_space<vmem>>, %arg2: memref<2x1024xf32, #tpu.memory_space<vmem>>) attributes {dimension_semantics = [#tpu.dimension_semantics<parallel>], iteration_bounds = array<i64: 1>, scalar_prefetch = 0 : i64, scratch_operands = 0 : i64, tpu.core_type = #tpu.core_type<tc>, window_params = [{transform_indices = @transform_0, window_bounds = array<i64: 2, 1024>}, {transform_indices = @transform_1, window_bounds = array<i64: 2, 1024>}]} {
    %c0 = arith.constant 0 : index
    %c0_0 = arith.constant 0 : index
    %0 = vector.load %arg1[%c0, %c0_0] : memref<2x1024xf32, #tpu.memory_space<vmem>>, vector<2x1024xf32>
    %1 = arith.mulf %0, %0 : vector<2x1024xf32>
    %2 = arith.mulf %0, %1 : vector<2x1024xf32>
    %cst = arith.constant 4.471500e-02 : f32
    %3 = vector.broadcast %cst : f32 to vector<2x1024xf32>
    %4 = arith.mulf %3, %2 : vector<2x1024xf32>
    %5 = arith.addf %0, %4 : vector<2x1024xf32>
    %cst_1 = arith.constant 0.797884583 : f32
    %6 = vector.broadcast %cst_1 : f32 to vector<2x1024xf32>
    %7 = arith.mulf %6, %5 : vector<2x1024xf32>
    %8 = math.tanh %7 : vector<2x1024xf32>
    %cst_2 = arith.constant 1.000000e+00 : f32
    %9 = vector.broadcast %cst_2 : f32 to vector<2x1024xf32>
    %10 = arith.addf %9, %8 : vector<2x1024xf32>
    %cst_3 = arith.constant 5.000000e-01 : f32
    %11 = vector.broadcast %cst_3 : f32 to vector<2x1024xf32>
    %12 = arith.mulf %11, %10 : vector<2x1024xf32>
    %13 = arith.mulf %0, %12 : vector<2x1024xf32>
    %14 = arith.addf %13, %0 : vector<2x1024xf32>
    %c0_4 = arith.constant 0 : index
    %c0_5 = arith.constant 0 : index
    %15 = vector.load %arg2[%c0_4, %c0_5] : memref<2x1024xf32, #tpu.memory_space<vmem>>, vector<2x1024xf32>
    tpu.vector_store %arg2[%c0_4, %c0_5], %14 {strides = array<i32>} : memref<2x1024xf32, #tpu.memory_space<vmem>>, vector<2x1024xf32>,
    return
  }
  func.func @transform_0(%arg0: i32) -> (i32, i32) {
    %c0_i32 = arith.constant 0 : i32
    %c0_i32_0 = arith.constant 0 : i32
    return %arg0, %c0_i32 : i32, i32
  }
  func.func @transform_1(%arg0: i32) -> (i32, i32) {
    %c0_i32 = arith.constant 0 : i32
    %c0_i32_0 = arith.constant 0 : i32
    return %arg0, %c0_i32 : i32, i32
  }
}

</mosaic_0001>

<llo_original>
// kernel: _residual_add_impl.1
$region0: #{_residual_add_impl.1}
  #allocation0 [shape = 'u32[]', space=smem, size = 0x4, offset = 0x4, fixed_abs, tag = 'smem constant byte address 0x4 - core index']
  #allocation1 [shape = 'u32[144,128]{1,0:T(1,128)}', space=vmem, size = 0x12000, scoped, tag = 'internal scratch']
  %s0 = inlined_call_operand.vmem [shape: f32[2,1024], index: 0, kind: input, shape index: {}]
  %s1 = inlined_call_operand.vmem [shape: f32[2,1024], index: 1, kind: output, shape index: {}]
  %s2 = sld [smem:[#allocation0]]
  $region14: #{_residual_add_impl.1} parent=0
    _
  %s4 = ssub.s32 1, %s2
  %s5 = scalar_select 0, %s4, %s2
  // Predicated region
  $region2: #{_residual_add_impl.1} parent=0 // pred_check
    _
  $region3: #{_residual_add_impl.1} parent=0 // pred_check_branch
    %7 = sbr.rel (0) target = $region5
  $region4: #{_residual_add_impl.1} parent=0 // pred_region
    _
  $region5: #{_residual_add_impl.1} parent=0 // pred_fallthru
    _
  %v8 = vld [vmem:[%s0] sm:$0xff]
  %v9 = vld [vmem:[%s0 + $0x8] sm:$0xff]
  %v10 = vmul.f32 %v8, %v8
  %v11 = vmul.f32 %v9, %v9
  %v12 = vmul.f32 %v8, %v10
  %v13 = vmul.f32 %v9, %v11
  %v14 = vmul.f32 %v12, 0.044715
  %v15 = vmul.f32 %v13, 0.044715
  %v16 = vadd.f32 %v8, %v14
  %v17 = vadd.f32 %v9, %v15
  %v18 = vmul.f32 %v16, 0.7978846
  %v19 = vmul.f32 %v17, 0.7978846
  %v20 = vtanh.pop %v18
  %v21 = vtanh.pop %v19
  %v22 = vadd.f32 %v20, 1.0
  %v23 = vadd.f32 %v21, 1.0
  %v24 = vmul.f32 %v22, 0.5
  %v25 = vmul.f32 %v23, 0.5
  %v26 = vmul.f32 %v8, %v24
  %v27 = vmul.f32 %v9, %v25
  %v28 = vadd.f32 %v26, %v8
  %v29 = vadd.f32 %v27, %v9
  %30 = vst [vmem:[%s1] sm:$0xff] %v28
  %31 = vst [vmem:[%s1 + $0x8] sm:$0xff] %v29
  // Predicated region
  $region6: #{_residual_add_impl.1} parent=0 // pred_check
    _
  $region7: #{_residual_add_impl.1} parent=0 // pred_check_branch
    %33 = sbr.rel (0) target = $region9
  $region8: #{_residual_add_impl.1} parent=0 // pred_region
    _
  $region9: #{_residual_add_impl.1} parent=0 // pred_fallthru
    _
  // Predicated region
  $region10: #{_residual_add_impl.1} parent=0 // pred_check
    _
  $region11: #{_residual_add_impl.1} parent=0 // pred_check_branch
    %35 = sbr.rel (0) target = $region13
  $region12: #{_residual_add_impl.1} parent=0 // pred_region
    _
  $region13: #{_residual_add_impl.1} parent=0 // pred_fallthru
    _

</llo_original>
